<compile_context>
chip_gen: v7x
topology: tpu7x:2x2x1
jax: 0.10.0
libtpu: 0.0.40
codegen_flags: <defaults>
</compile_context>

<pallas_src>
import functools

import jax
import jax.numpy as jnp
from jax.experimental import pallas as pl
from jax.experimental.pallas import tpu as pltpu


def _round_up(x, m):
    return ((x + m - 1) // m) * m


def _pick_tile(dim, max_tile, granule):
    """Largest multiple of `granule` that divides `dim` and is <= max_tile."""
    best = granule
    t = granule
    limit = min(dim, max_tile)
    while t <= limit:
        if dim % t == 0:
            best = t
        t += granule
    return best


def _conv1x1_kernel(*refs, use_bn, use_relu, negative_slope, k_tiled):
    if use_bn:
        x_ref, w_ref, shift_ref, o_ref = refs
    else:
        x_ref, w_ref, o_ref = refs
        shift_ref = None

    if not k_tiled:
        # Whole reduction in one MXU pass: bf16 x bf16 -> f32.
        y = jnp.dot(x_ref[...], w_ref[...], preferred_element_type=jnp.float32)
        if use_bn:
            y = y + shift_ref[...]
        if use_relu:
            y = jnp.where(y >= 0, y, negative_slope * y)
        o_ref[...] = y.astype(o_ref.dtype)
    else:
        k = pl.program_id(2)

        @pl.when(k == 0)
        def _():
            if use_bn:
                # Seed the accumulator with the BN shift (saves an epilogue add).
                o_ref[...] = jnp.broadcast_to(shift_ref[...], o_ref.shape)
            else:
                o_ref[...] = jnp.zeros_like(o_ref)

        # Accumulate directly into the VMEM-resident f32 output block.
        o_ref[...] += jnp.dot(x_ref[...], w_ref[...],
                              preferred_element_type=jnp.float32)

        if use_relu:
            @pl.when(k == pl.num_programs(2) - 1)
            def _():
                y = o_ref[...]
                o_ref[...] = jnp.where(y >= 0, y, negative_slope * y)


def prepare_conv_params(weight, bn_gamma=None, bn_beta=None, bn_mean=None,
                        bn_var=None, *, BN=False, eps=1e-5):
    """One-time weight prep (hoisted out of the per-call path).

    Transposes the 1x1 Conv2d weight to (C_in, C_out), folds the eval-mode
    BatchNorm scale into it, casts to bf16 and zero-pads to lane-aligned dims.
    """
    C_out, C_in = weight.shape[0], weight.shape[1]
    w2d = jnp.transpose(weight.reshape(C_out, C_in)).astype(jnp.float32)

    shift = None
    if BN:
        # TODO(synk): PyTorch BatchNorm2d in training mode uses batch
        # statistics; only eval-mode running stats are folded here.
        scale = bn_gamma.astype(jnp.float32) / jnp.sqrt(
            bn_var.astype(jnp.float32) + eps)
        shift = bn_beta.astype(jnp.float32) - bn_mean.astype(jnp.float32) * scale
        w2d = w2d * scale[None, :]

    c_in_p = _round_up(C_in, 128)
    c_out_p = _round_up(C_out, 128)

    w_bf = w2d.astype(jnp.bfloat16)
    if (c_in_p, c_out_p) != (C_in, C_out):
        w_bf = jnp.zeros((c_in_p, c_out_p), jnp.bfloat16).at[:C_in, :C_out].set(w_bf)

    shift_p = None
    if BN:
        shift_p = jnp.zeros((1, c_out_p), jnp.float32).at[0, :C_out].set(shift)

    return {"w": w_bf, "shift": shift_p, "C_in": C_in, "C_out": C_out, "BN": BN}


def conv_apply(x_nchw, params, *, relu=False):
    """Forward pass with prepared weights.  Returns (N, C_out) float32."""
    N, C_in, H, W = x_nchw.shape
    assert H == 1 and W == 1, "module semantics require 1x1 spatial input"
    assert C_in == params["C_in"]
    C_out = params["C_out"]
    use_bn = params["BN"]
    w_p = params["w"]
    c_in_p, c_out_p = w_p.shape

    # Light padding only (sublane 16 for bf16, lane 128); skip the pad pass
    # entirely when already aligned.
    n_p = _round_up(N, 16)
    x_bf = x_nchw.reshape(N, C_in).astype(jnp.bfloat16)
    if (n_p, c_in_p) != (N, C_in):
        x_bf = jnp.zeros((n_p, c_in_p), jnp.bfloat16).at[:N, :C_in].set(x_bf)

    # --- tile selection (tiles divide the padded dims -> no extra padding) ---
    if c_in_p <= 2048:
        tile_k = c_in_p          # collapse the reduction axis: read x/w once
        k_tiled = False
    else:
        tile_k = _pick_tile(c_in_p, 2048, 128)
        k_tiled = True
    tile_m = _pick_tile(n_p, 512, 16)
    tile_n = _pick_tile(c_out_p, 1024, 128)

    grid_m = n_p // tile_m
    grid_n = c_out_p // tile_n
    # v7x has 2 TensorCores: guarantee >= 2 blocks along a parallel axis.
    if grid_m * grid_n == 1:
        if tile_n >= 256:
            tile_n //= 2
        elif tile_m % 32 == 0:
            tile_m //= 2
        grid_m = n_p // tile_m
        grid_n = c_out_p // tile_n
    grid_k = c_in_p // tile_k

    # Double-buffered bf16 inputs + double-buffered f32 output block.
    vmem_bytes = (2 * (tile_m * tile_k + tile_k * tile_n) * 2
                  + 2 * tile_m * tile_n * 4)
    vmem_limit = min(max(int(vmem_bytes * 1.5) + (2 << 20), 32 << 20), 48 << 20)

    if k_tiled:
        grid = (grid_m, grid_n, grid_k)
        x_map = lambda i, j, k: (i, k)
        w_map = lambda i, j, k: (k, j)
        s_map = lambda i, j, k: (0, j)
        o_map = lambda i, j, k: (i, j)
        semantics = ("parallel", "parallel", "arbitrary")
    else:
        grid = (grid_m, grid_n)
        x_map = lambda i, j: (i, 0)
        w_map = lambda i, j: (0, j)
        s_map = lambda i, j: (0, j)
        o_map = lambda i, j: (i, j)
        semantics = ("parallel", "parallel")

    in_specs = [pl.BlockSpec((tile_m, tile_k), x_map),
                pl.BlockSpec((tile_k, tile_n), w_map)]
    args = [x_bf, w_p]
    if use_bn:
        in_specs.append(pl.BlockSpec((1, tile_n), s_map))
        args.append(params["shift"])

    # negative_slope matches the module's LeakyReLU(0.25).
    kernel = functools.partial(_conv1x1_kernel, use_bn=use_bn, use_relu=relu,
                               negative_slope=0.25, k_tiled=k_tiled)

    out_p = pl.pallas_call(
        kernel,
        out_shape=jax.ShapeDtypeStruct((n_p, c_out_p), jnp.float32),
        grid_spec=pltpu.PrefetchScalarGridSpec(
            num_scalar_prefetch=0,
            grid=grid,
            in_specs=in_specs,
            out_specs=pl.BlockSpec((tile_m, tile_n), o_map),
        ),
        compiler_params=pltpu.CompilerParams(
            dimension_semantics=semantics,
            vmem_limit_bytes=vmem_limit,
            allow_input_fusion=[True] * len(args),
        ),
        cost_estimate=pl.CostEstimate(
            flops=2 * n_p * c_in_p * c_out_p,
            transcendentals=0,
            bytes_accessed=(x_bf.size * 2 + w_p.size * 2 + n_p * c_out_p * 4),
        ),
    )(*args)

    return out_p[:N, :C_out]


def conv_forward(x_nchw, weight, bn_gamma=None, bn_beta=None, bn_mean=None,
                 bn_var=None, *, relu=False, BN=False, eps=1e-5):
    """Convenience wrapper matching the original module signature."""
    params = prepare_conv_params(weight, bn_gamma, bn_beta, bn_mean, bn_var,
                                 BN=BN, eps=eps)
    return conv_apply(x_nchw, params, relu=relu)


def init_conv_params(key, input_dim, output_dim):
    """kaiming_normal_(mode='fan_out', nonlinearity='relu') for a 1x1 Conv2d."""
    fan_out = output_dim * 1 * 1
    std = (2.0 / fan_out) ** 0.5
    return jax.random.normal(key, (output_dim, input_dim, 1, 1), jnp.float32) * std


if __name__ == "__main__":
    key = jax.random.PRNGKey(0)
    k_x, k_w, k_x2, k_w2 = jax.random.split(key, 4)

    # --- small case: default module config conv(32, 16) -> relu=False, BN=False
    N, C_in, C_out = 8, 32, 16
    x = jax.random.normal(k_x, (N, C_in, 1, 1), jnp.float32)
    weight = init_conv_params(k_w, C_in, C_out)

    # BatchNorm2d per weights_init_kaiming: weight=1, bias=0; init stats 0/1.
    gamma = jnp.ones((C_out,), jnp.float32)
    beta = jnp.zeros((C_out,), jnp.float32)
    r_mean = jnp.zeros((C_out,), jnp.float32)
    r_var = jnp.ones((C_out,), jnp.float32)
    eps = 1e-5

    y = conv_forward(x, weight, relu=False, BN=False)
    y2 = conv_forward(x, weight, gamma, beta, r_mean, r_var, relu=True, BN=True)
    jax.block_until_ready((y, y2))

    # References use the same bf16-quantized operands the kernel sees.
    x2d = x.reshape(N, C_in)
    w2d = weight.reshape(C_out, C_in).T
    x_bf = x2d.astype(jnp.bfloat16).astype(jnp.float32)
    w_bf = w2d.astype(jnp.bfloat16).astype(jnp.float32)
    ref = jnp.dot(x_bf, w_bf, precision=jax.lax.Precision.HIGHEST)
    assert y.shape == (N, C_out)
    assert jnp.allclose(y, ref, atol=2e-3), "mismatch vs reference"

    scale = gamma / jnp.sqrt(r_var + eps)
    shift = beta - r_mean * scale
    w_s_bf = (w2d * scale[None, :]).astype(jnp.bfloat16).astype(jnp.float32)
    ref2 = jnp.dot(x_bf, w_s_bf, precision=jax.lax.Precision.HIGHEST) + shift
    ref2 = jnp.where(ref2 >= 0, ref2, 0.25 * ref2)
    assert y2.shape == (N, C_out)
    assert jnp.allclose(y2, ref2, atol=2e-3), "mismatch vs BN/relu reference"

    # --- medium case: multi-block parallel grid + prepared-weights path ---
    N2, C_in2, C_out2 = 256, 384, 512
    x_b = jax.random.normal(k_x2, (N2, C_in2, 1, 1), jnp.float32)
    w_b = init_conv_params(k_w2, C_in2, C_out2)
    params = prepare_conv_params(w_b)          # weight prep hoisted, done once
    y3 = conv_apply(x_b, params, relu=True)
    jax.block_until_ready(y3)

    x_b_bf = x_b.reshape(N2, C_in2).astype(jnp.bfloat16).astype(jnp.float32)
    w_b_bf = w_b.reshape(C_out2, C_in2).T.astype(jnp.bfloat16).astype(jnp.float32)
    ref3 = jnp.dot(x_b_bf, w_b_bf, precision=jax.lax.Precision.HIGHEST)
    ref3 = jnp.where(ref3 >= 0, ref3, 0.25 * ref3)
    assert y3.shape == (N2, C_out2)
    assert jnp.allclose(y3, ref3, atol=2e-3), "mismatch vs medium reference"

    print("KERNEL_OK")
</pallas_src>

<mosaic_0001>
module attributes {stable_mosaic.version = 11 : i64} {
  func.func @_conv1x1_kernel(%arg0: i32, %arg1: i32, %arg2: memref<16x128xbf16, #tpu.memory_space<vmem>>, %arg3: memref<128x128xbf16, #tpu.memory_space<vmem>>, %arg4: memref<16x128xf32, #tpu.memory_space<vmem>>) attributes {dimension_semantics = [#tpu.dimension_semantics<parallel>, #tpu.dimension_semantics<parallel>], iteration_bounds = array<i64: 1, 1>, scalar_prefetch = 0 : i64, scratch_operands = 0 : i64, tpu.core_type = #tpu.core_type<tc>, window_params = [{transform_indices = @transform_0, window_bounds = array<i64: 16, 128>}, {transform_indices = @transform_1, window_bounds = array<i64: 128, 128>}, {transform_indices = @transform_2, window_bounds = array<i64: 16, 128>}]} {
    %c0 = arith.constant 0 : index
    %c0_0 = arith.constant 0 : index
    %0 = vector.load %arg2[%c0, %c0_0] : memref<16x128xbf16, #tpu.memory_space<vmem>>, vector<16x128xbf16>
    %c0_1 = arith.constant 0 : index
    %c0_2 = arith.constant 0 : index
    %1 = vector.load %arg3[%c0_1, %c0_2] : memref<128x128xbf16, #tpu.memory_space<vmem>>, vector<128x128xbf16>
    %cst = arith.constant dense<0.000000e+00> : vector<16x128xf32>
    %2 = tpu.matmul %0, %1, %cst {dimension_numbers = #tpu.dot_dimension_numbers<[1], [0], [0], [1], [0, 0, 1, 1], [], []>} : vector<16x128xbf16>, vector<128x128xbf16>, vector<16x128xf32> -> vector<16x128xf32>
    %c0_3 = arith.constant 0 : index
    %c0_4 = arith.constant 0 : index
    %3 = vector.load %arg4[%c0_3, %c0_4] : memref<16x128xf32, #tpu.memory_space<vmem>>, vector<16x128xf32>
    tpu.vector_store %arg4[%c0_3, %c0_4], %2 {strides = array<i32>} : memref<16x128xf32, #tpu.memory_space<vmem>>, vector<16x128xf32>,
    return
  }
  func.func @transform_0(%arg0: i32, %arg1: i32) -> (i32, i32) {
    %c0_i32 = arith.constant 0 : i32
    %c0_i32_0 = arith.constant 0 : i32
    return %arg0, %c0_i32 : i32, i32
  }
  func.func @transform_1(%arg0: i32, %arg1: i32) -> (i32, i32) {
    %c0_i32 = arith.constant 0 : i32
    %c0_i32_0 = arith.constant 0 : i32
    return %c0_i32, %arg1 : i32, i32
  }
  func.func @transform_2(%arg0: i32, %arg1: i32) -> (i32, i32) {
    %c0_i32 = arith.constant 0 : i32
    return %arg0, %arg1 : i32, i32
  }
}

</mosaic_0001>

<llo_original>
// kernel: tpu_custom_call.1
$region0: #{tpu_custom_call.1}
  #allocation0 [shape = 'u32[]', space=smem, size = 0x4, offset = 0x4, fixed_abs, tag = 'smem constant byte address 0x4 - core index']
  #allocation1 [shape = 'u32[144,128]{1,0:T(1,128)}', space=vmem, size = 0x12000, scoped, tag = 'internal scratch']
  %s0 = inlined_call_operand.hbm [shape: bf16[16,128], index: 0, kind: input, shape index: {}]
  %s1 = inlined_call_operand.hbm [shape: bf16[128,128], index: 1, kind: input, shape index: {}]
  %s2 = inlined_call_operand.hbm [shape: f32[16,128], index: 2, kind: output, shape index: {}]
  %s3 = sld [smem:[#allocation0]]
  $region26: #{tpu_custom_call.1} parent=0
    _
  %s5 = ssub.s32 1, %s3
  %s6 = scalar_select 0, %s5, %s3
  $region1: #{tpu_custom_call.1} parent=0
    #allocation2 [shape = 'u8[4096]{0}', space=vmem, size = 0x1000, scoped, tag = 'input window, operand 0, single buffered']
    #allocation3 [shape = 's32[1]{0}', space=sflag, size = 0x4, scoped, tag = 'scoped memory for tpu_custom_call.1']
    #allocation4 [shape = 's32[1]{0}', space=sflag, size = 0x4, scoped, tag = 'scoped memory for tpu_custom_call.1']
    #allocation5 [shape = 'u8[32768]{0}', space=vmem, size = 0x8000, scoped, tag = 'input window, operand 1, single buffered']
    #allocation6 [shape = 's32[1]{0}', space=sflag, size = 0x4, scoped, tag = 'scoped memory for tpu_custom_call.1']
    #allocation7 [shape = 'u8[8192]{0}', space=vmem, size = 0x2000, scoped, tag = 'output window, operand 0, single buffered']
    %7 = vsyncpa [#allocation3], 0
    %8 = vsyncpa [#allocation6], 0
    %9 = vsyncpa [#allocation4], 0
    // Predicated region
    $region2: #{tpu_custom_call.1} parent=1 // pred_check
      _
    $region3: #{tpu_custom_call.1} parent=1 // pred_check_branch
      %11 = sbr.rel (0) target = $region5
    $region4: #{tpu_custom_call.1} parent=1 // pred_region
      %s13 = ssub.s32 128, 128
      %14 = vsyncadd [#allocation3], %s13
      %s15 = sshll.u32 [#allocation2], 4
      %s16 = int_to_ptr.vmem [resolvable:$true] %s15
      %21 = dma.hbm_to_vmem [thread:$0]  %s0, 128, %s16, [#allocation3], 64, 64, 4
    $region5: #{tpu_custom_call.1} parent=1 // pred_fallthru
      _
    // Predicated region
    $region6: #{tpu_custom_call.1} parent=1 // pred_check
      _
    $region7: #{tpu_custom_call.1} parent=1 // pred_check_branch
      %23 = sbr.rel (0) target = $region9
    $region8: #{tpu_custom_call.1} parent=1 // pred_region
      %s25 = ssub.s32 1024, 1024
      %26 = vsyncadd [#allocation6], %s25
      %s27 = sshll.u32 [#allocation5], 4
      %s28 = int_to_ptr.vmem [resolvable:$true] %s27
      %33 = dma.hbm_to_vmem [thread:$0]  %s1, 1024, %s28, [#allocation6], 64, 64, 4
    $region9: #{tpu_custom_call.1} parent=1 // pred_fallthru
      _
    // Predicated region
    $region10: #{tpu_custom_call.1} parent=1 // pred_check
      _
    $region11: #{tpu_custom_call.1} parent=1 // pred_check_branch
      %35 = sbr.rel (0) target = $region13
    $region12: #{tpu_custom_call.1} parent=1 // pred_region
      %36 = dma.done [#allocation3], 128
    $region13: #{tpu_custom_call.1} parent=1 // pred_fallthru
      _
    // Predicated region
    $region14: #{tpu_custom_call.1} parent=1 // pred_check
      _
    $region15: #{tpu_custom_call.1} parent=1 // pred_check_branch
      %38 = sbr.rel (0) target = $region17
    $region16: #{tpu_custom_call.1} parent=1 // pred_region
      %39 = dma.done [#allocation6], 1024
    $region17: #{tpu_custom_call.1} parent=1 // pred_fallthru
      _
    %v41 = vld [vmem:[#allocation2] sm:$0xf]
    %v42 = vld [vmem:[#allocation2 + $0x4] sm:$0xf]
    %v43 = vld [vmem:[#allocation5] sm:$0xf]
    %v44 = vld [vmem:[#allocation5 + $0x4] sm:$0xf]
    %v45 = vld [vmem:[#allocation5 + $0x8] sm:$0xf]
    %v46 = vld [vmem:[#allocation5 + $0xc] sm:$0xf]
    %v47 = vld [vmem:[#allocation5 + $0x10] sm:$0xf]
    %v48 = vld [vmem:[#allocation5 + $0x14] sm:$0xf]
    %v49 = vld [vmem:[#allocation5 + $0x18] sm:$0xf]
    %v50 = vld [vmem:[#allocation5 + $0x1c] sm:$0xf]
    %v51 = vld [vmem:[#allocation5 + $0x20] sm:$0xf]
    %v52 = vld [vmem:[#allocation5 + $0x24] sm:$0xf]
    %v53 = vld [vmem:[#allocation5 + $0x28] sm:$0xf]
    %v54 = vld [vmem:[#allocation5 + $0x2c] sm:$0xf]
    %v55 = vld [vmem:[#allocation5 + $0x30] sm:$0xf]
    %v56 = vld [vmem:[#allocation5 + $0x34] sm:$0xf]
    %v57 = vld [vmem:[#allocation5 + $0x38] sm:$0xf]
    %v58 = vld [vmem:[#allocation5 + $0x3c] sm:$0xf]
    %v61 = vunpack.c.l.b16 %v41
    %v62 = vunpack.c.l.b16 %v42
    %v63 = vpack.c.b16 %v62, %v61
    %v81 = vunpack.c.l.b16 %v43
    %v82 = vunpack.c.l.b16 %v44
    %v83 = vunpack.c.l.b16 %v45
    %v84 = vunpack.c.l.b16 %v46
    %v85 = vunpack.c.l.b16 %v47
    %v86 = vunpack.c.l.b16 %v48
    %v87 = vunpack.c.l.b16 %v49
    %v88 = vunpack.c.l.b16 %v50
    %v89 = vunpack.c.l.b16 %v51
    %v90 = vunpack.c.l.b16 %v52
    %v91 = vunpack.c.l.b16 %v53
    %v92 = vunpack.c.l.b16 %v54
    %v93 = vunpack.c.l.b16 %v55
    %v94 = vunpack.c.l.b16 %v56
    %v95 = vunpack.c.l.b16 %v57
    %v96 = vunpack.c.l.b16 %v58
    %v97 = vpack.c.b16 %v82, %v81
    %v98 = vpack.c.b16 %v84, %v83
    %v99 = vpack.c.b16 %v86, %v85
    %v100 = vpack.c.b16 %v88, %v87
    %v101 = vpack.c.b16 %v90, %v89
    %v102 = vpack.c.b16 %v92, %v91
    %v103 = vpack.c.b16 %v94, %v93
    %v104 = vpack.c.b16 %v96, %v95
    %113 = vmatprep.subr.bf16.mxu0 0
    %114 = vmatpush1.bf16.msra.mxu0 %v97
    %115 = vmatprep.subr.bf16.mxu0 0
    %116 = vmatpush1.bf16.msra.mxu0 %v98
    %117 = vmatprep.subr.bf16.mxu0 0
    %118 = vmatpush1.bf16.msra.mxu0 %v99
    %119 = vmatprep.subr.bf16.mxu0 0
    %120 = vmatpush1.bf16.msra.mxu0 %v100
    %121 = vmatprep.subr.bf16.mxu0 0
    %122 = vmatpush1.bf16.msra.mxu0 %v101
    %123 = vmatprep.subr.bf16.mxu0 0
    %124 = vmatpush1.bf16.msra.mxu0 %v102
    %125 = vmatprep.subr.bf16.mxu0 0
    %126 = vmatpush1.bf16.msra.mxu0 %v103
    %127 = vmatprep.subr.bf16.mxu0 0
    %128 = vmatpush1.bf16.msra.mxu0 %v104
    %129 = vmatprep.subr.bf16.mxu0 0
    %130 = vmatpush1.bf16.msra.mxu0 0
    %131 = vmatprep.subr.bf16.mxu0 0
    %132 = vmatpush1.bf16.msra.mxu0 0
    %133 = vmatprep.subr.bf16.mxu0 0
    %134 = vmatpush1.bf16.msra.mxu0 0
    %135 = vmatprep.subr.bf16.mxu0 0
    %136 = vmatpush1.bf16.msra.mxu0 0
    %137 = vmatprep.subr.bf16.mxu0 0
    %138 = vmatpush1.bf16.msra.mxu0 0
    %139 = vmatprep.subr.bf16.mxu0 0
    %140 = vmatpush1.bf16.msra.mxu0 0
    %141 = vmatprep.subr.bf16.mxu0 0
    %142 = vmatpush1.bf16.msra.mxu0 0
    %143 = vmatprep.subr.bf16.mxu0 0
    %144 = vmatpush1.bf16.msra.mxu0 0
    %145 = vmatprep.mubr.bf16.mxu0 0
    %146 = vmatmul.mubr.bf16.gmra.mrb[0].mxu0 %v63
    %v147 = vpop.f32.mrb[0].mxu0
    %v148 = vadd.f32 0.0, %v147
    %v149 = vpop.f32.mrb[0].mxu0
    %v150 = vpop.f32.mrb[0].mxu0
    %v151 = vadd.f32 0.0, %v150
    %v152 = vpop.f32.mrb[0].mxu0
    %153 = vdwg.mxu0
    %154 = vst [vmem:[#allocation7] sm:$0xff] %v148
    %155 = vst [vmem:[#allocation7 + $0x8] sm:$0xff] %v151
    // Predicated region
    $region18: #{tpu_custom_call.1} parent=1 // pred_check
      _
    $region19: #{tpu_custom_call.1} parent=1 // pred_check_branch
      %157 = sbr.rel (0) target = $region21
    $region20: #{tpu_custom_call.1} parent=1 // pred_region
      %s159 = ssub.s32 256, 256
      %160 = vsyncadd [#allocation4], %s159
      %s161 = sshll.u32 [#allocation7], 4
      %s162 = int_to_ptr.vmem [resolvable:$true] %s161
      %167 = dma.vmem_to_hbm [thread:$0]  %s162, 256, %s2, [#allocation4], 128, 128, 8
    $region21: #{tpu_custom_call.1} parent=1 // pred_fallthru
      _
    // Predicated region
    $region22: #{tpu_custom_call.1} parent=1 // pred_check
      _
    $region23: #{tpu_custom_call.1} parent=1 // pred_check_branch
      %169 = sbr.rel (0) target = $region25
    $region24: #{tpu_custom_call.1} parent=1 // pred_region
      %170 = dma.done [#allocation4], 256
    $region25: #{tpu_custom_call.1} parent=1 // pred_fallthru
      _
    %171 = vsyncpa [#allocation3], 1
    %172 = vsyncpa [#allocation6], 1
    %173 = vsyncpa [#allocation4], 1

</llo_original>
